<compile_context>
chip_gen: v7x
topology: tpu7x:2x2x1
jax: 0.10.0
libtpu: 0.0.40
codegen_flags: <defaults>
</compile_context>

<pallas_src>
import jax
import jax.numpy as jnp
from jax.experimental import pallas as pl
from jax.experimental.pallas import tpu as pltpu


def _round_up(n, m):
    return ((n + m - 1) // m) * m


def _make_categorical_logits_kernel(compute_dtype):
    def kernel(x_ref, wt_ref, b_ref, logits_ref):
        # x: (TB, D_in), wt: (D_in, D_out), b: (1, D_out)
        x = x_ref[...].astype(compute_dtype)
        wt = wt_ref[...].astype(compute_dtype)
        y = jnp.dot(x, wt, preferred_element_type=jnp.float32) + b_ref[...]
        # torch.distributions.Categorical(logits=y) normalizes:
        # logits = y - logsumexp(y)
        m = jnp.max(y, axis=-1, keepdims=True)
        e = jnp.exp(y - m)
        s = jnp.sum(e, axis=-1, keepdims=True)
        logits_ref[...] = (y - (m + jnp.log(s))).astype(logits_ref.dtype)

    return kernel


def categorical_net_forward(x, weight_t, bias, *, block_b=512,
                            compute_dtype=jnp.float32):
    """x: (B, D_in); weight_t: (D_in, D_out) pre-transposed; bias: (D_out,)."""
    B, D_in = x.shape
    D_out = weight_t.shape[1]

    # Batch tile: multiple of 8 sublanes, capped at block_b (multiple of 128).
    TB = min(block_b, _round_up(B, 8))
    B_pad = _round_up(B, TB)
    if B_pad != B:
        x = jnp.pad(x, ((0, B_pad - B), (0, 0)))
    b2 = bias.reshape(1, D_out).astype(jnp.float32)

    logits = pl.pallas_call(
        _make_categorical_logits_kernel(compute_dtype),
        out_shape=jax.ShapeDtypeStruct((B_pad, D_out), jnp.float32),
        grid_spec=pltpu.PrefetchScalarGridSpec(
            num_scalar_prefetch=0,
            grid=(B_pad // TB,),
            in_specs=[
                pl.BlockSpec((TB, D_in), lambda i: (i, 0)),      # x tile moves
                pl.BlockSpec((D_in, D_out), lambda i: (0, 0)),   # weight resident
                pl.BlockSpec((1, D_out), lambda i: (0, 0)),      # bias resident
            ],
            out_specs=pl.BlockSpec((TB, D_out), lambda i: (i, 0)),
        ),
        compiler_params=pltpu.CompilerParams(
            dimension_semantics=("parallel",),
        ),
    )(x, weight_t, b2)

    if B_pad != B:
        logits = logits[:B]
    return logits


class CustomFixedCategorical:
    """JAX mirror of the torch CustomFixedCategorical the module returns."""

    def __init__(self, logits):
        self.logits = logits          # normalized logits (B, A)
        self._probs = None

    @property
    def probs(self):
        if self._probs is None:
            # logits are already log-probabilities, so probs = exp(logits).
            self._probs = jnp.exp(self.logits)
        return self._probs

    def mode(self):
        return jnp.argmax(self.logits, axis=-1, keepdims=True)

    def log_probs(self, actions):
        a = jnp.squeeze(actions, axis=-1)
        lp = jnp.take_along_axis(self.logits, a[:, None], axis=-1)[:, 0]
        return lp.reshape(actions.shape[0], -1).sum(-1)[:, None]

    def sample(self, key):
        return jax.random.categorical(key, self.logits, axis=-1)[:, None]


class CategoricalNet:
    def __init__(self, num_inputs, num_outputs, key):
        # nn.init.orthogonal_(weight, gain=0.01): QR-based orthogonal init.
        a = jax.random.normal(key, (num_outputs, num_inputs), dtype=jnp.float32)
        if num_outputs < num_inputs:
            q, r = jnp.linalg.qr(a.T)
            q = q * jnp.sign(jnp.diag(r))
            w = q.T[:num_outputs, :]
        else:
            q, r = jnp.linalg.qr(a)
            q = q * jnp.sign(jnp.diag(r))
            w = q[:, :num_inputs]
        self.weight = 0.01 * w                       # (D_out, D_in), torch layout
        self.weight_t = jnp.asarray(self.weight).T   # (D_in, D_out), paid once
        self.bias = jnp.zeros((num_outputs,), dtype=jnp.float32)

    def __call__(self, x, *, compute_dtype=jnp.float32):
        logits = categorical_net_forward(
            x, self.weight_t, self.bias, compute_dtype=compute_dtype)
        return CustomFixedCategorical(logits)


if __name__ == "__main__":
    key = jax.random.PRNGKey(0)
    k_w, k_x, k_x2 = jax.random.split(key, 3)

    # Small shapes consistent with the module (habitat action head).
    batch, num_inputs, num_outputs = 8, 32, 4
    net = CategoricalNet(num_inputs, num_outputs, k_w)
    x = jax.random.normal(k_x, (batch, num_inputs), dtype=jnp.float32)

    dist = net(x)
    jax.block_until_ready(dist.logits)

    # Reference check against plain JAX (f32 path, tight tolerance).
    y_ref = x @ net.weight.T + net.bias
    logits_ref = y_ref - jax.scipy.special.logsumexp(y_ref, axis=-1, keepdims=True)
    probs_ref = jax.nn.softmax(y_ref, axis=-1)
    assert jnp.allclose(dist.logits, logits_ref, atol=1e-5)
    assert jnp.allclose(dist.probs, probs_ref, atol=1e-5)

    _ = dist.mode()
    _ = dist.log_probs(dist.mode())
    _ = dist.sample(jax.random.PRNGKey(1))

    # Larger batch exercising the multi-tile pipelined grid + padding path.
    big_b, big_in, big_out = 1000, 256, 6
    net2 = CategoricalNet(big_in, big_out, k_w)
    x2 = jax.random.normal(k_x2, (big_b, big_in), dtype=jnp.float32)

    logits2 = categorical_net_forward(x2, net2.weight_t, net2.bias)
    jax.block_until_ready(logits2)
    y2 = x2 @ net2.weight.T + net2.bias
    logits2_ref = y2 - jax.scipy.special.logsumexp(y2, axis=-1, keepdims=True)
    assert jnp.allclose(logits2, logits2_ref, atol=1e-4)

    # bf16 MXU input path (v6e/v7x friendly), f32 accumulation, looser tolerance.
    logits2_bf16 = categorical_net_forward(
        x2, net2.weight_t, net2.bias, compute_dtype=jnp.bfloat16)
    jax.block_until_ready(logits2_bf16)
    assert jnp.allclose(logits2_bf16, logits2_ref, atol=5e-2)

    print("KERNEL_OK")
</pallas_src>

<mosaic_0001>
module attributes {stable_mosaic.version = 11 : i64} {
  func.func @kernel(%arg0: i32, %arg1: memref<8x32xf32, #tpu.memory_space<vmem>>, %arg2: memref<32x4xf32, #tpu.memory_space<vmem>>, %arg3: memref<1x4xf32, #tpu.memory_space<vmem>>, %arg4: memref<8x4xf32, #tpu.memory_space<vmem>>) attributes {dimension_semantics = [#tpu.dimension_semantics<parallel>], iteration_bounds = array<i64: 1>, scalar_prefetch = 0 : i64, scratch_operands = 0 : i64, tpu.core_type = #tpu.core_type<tc>, window_params = [{transform_indices = @transform_0, window_bounds = array<i64: 8, 32>}, {pipeline_mode = #tpu.pipeline_mode<synchronous>, transform_indices = @transform_1, window_bounds = array<i64: 32, 4>}, {pipeline_mode = #tpu.pipeline_mode<synchronous>, transform_indices = @transform_2, window_bounds = array<i64: 1, 4>}, {transform_indices = @transform_3, window_bounds = array<i64: 8, 4>}]} {
    %c0 = arith.constant 0 : index
    %c0_0 = arith.constant 0 : index
    %0 = vector.load %arg1[%c0, %c0_0] : memref<8x32xf32, #tpu.memory_space<vmem>>, vector<8x32xf32>
    %c0_1 = arith.constant 0 : index
    %c0_2 = arith.constant 0 : index
    %1 = vector.load %arg2[%c0_1, %c0_2] : memref<32x4xf32, #tpu.memory_space<vmem>>, vector<32x4xf32>
    %cst = arith.constant dense<0.000000e+00> : vector<8x4xf32>
    %2 = tpu.matmul %0, %1, %cst {dimension_numbers = #tpu.dot_dimension_numbers<[1], [0], [0], [1], [0, 0, 1, 1], [], []>} : vector<8x32xf32>, vector<32x4xf32>, vector<8x4xf32> -> vector<8x4xf32>
    %c0_3 = arith.constant 0 : index
    %c0_4 = arith.constant 0 : index
    %3 = vector.load %arg3[%c0_3, %c0_4] : memref<1x4xf32, #tpu.memory_space<vmem>>, vector<1x4xf32>
    %4 = vector.broadcast %3 : vector<1x4xf32> to vector<8x4xf32>
    %5 = arith.addf %2, %4 : vector<8x4xf32>
    %cst_5 = arith.constant dense<0xFF800000> : vector<8xf32>
    %6 = vector.multi_reduction <maximumf>, %5, %cst_5 [1] : vector<8x4xf32> to vector<8xf32>
    %7 = vector.shape_cast %6 : vector<8xf32> to vector<8x1xf32>
    %8 = vector.broadcast %7 : vector<8x1xf32> to vector<8x4xf32>
    %9 = arith.subf %5, %8 : vector<8x4xf32>
    %10 = math.exp %9 : vector<8x4xf32>
    %cst_6 = arith.constant dense<0.000000e+00> : vector<8xf32>
    %11 = vector.multi_reduction <add>, %10, %cst_6 [1] : vector<8x4xf32> to vector<8xf32>
    %12 = vector.shape_cast %11 : vector<8xf32> to vector<8x1xf32>
    %13 = math.log %12 : vector<8x1xf32>
    %14 = arith.addf %7, %13 : vector<8x1xf32>
    %15 = vector.broadcast %14 : vector<8x1xf32> to vector<8x4xf32>
    %16 = arith.subf %5, %15 : vector<8x4xf32>
    %c0_7 = arith.constant 0 : index
    %c0_8 = arith.constant 0 : index
    %17 = vector.load %arg4[%c0_7, %c0_8] : memref<8x4xf32, #tpu.memory_space<vmem>>, vector<8x4xf32>
    tpu.vector_store %arg4[%c0_7, %c0_8], %16 {strides = array<i32>} : memref<8x4xf32, #tpu.memory_space<vmem>>, vector<8x4xf32>,
    return
  }
  func.func @transform_0(%arg0: i32) -> (i32, i32) {
    %c0_i32 = arith.constant 0 : i32
    %c0_i32_0 = arith.constant 0 : i32
    return %arg0, %c0_i32 : i32, i32
  }
  func.func @transform_1(%arg0: i32) -> (i32, i32) {
    %c0_i32 = arith.constant 0 : i32
    %c0_i32_0 = arith.constant 0 : i32
    %c0_i32_1 = arith.constant 0 : i32
    return %c0_i32, %c0_i32_0 : i32, i32
  }
  func.func @transform_2(%arg0: i32) -> (i32, i32) {
    %c0_i32 = arith.constant 0 : i32
    %c0_i32_0 = arith.constant 0 : i32
    %c0_i32_1 = arith.constant 0 : i32
    return %c0_i32, %c0_i32_0 : i32, i32
  }
  func.func @transform_3(%arg0: i32) -> (i32, i32) {
    %c0_i32 = arith.constant 0 : i32
    %c0_i32_0 = arith.constant 0 : i32
    return %arg0, %c0_i32 : i32, i32
  }
}

</mosaic_0001>

<llo_original>
// kernel: tpu_custom_call.1
$region0: #{tpu_custom_call.1}
  #allocation0 [shape = 'u32[]', space=smem, size = 0x4, offset = 0x4, fixed_abs, tag = 'smem constant byte address 0x4 - core index']
  #allocation1 [shape = 'u32[144,128]{1,0:T(1,128)}', space=vmem, size = 0x12000, scoped, tag = 'internal scratch']
  %s0 = inlined_call_operand.vmem [shape: f32[8,32], index: 0, kind: input, shape index: {}]
  %s1 = inlined_call_operand.vmem [shape: f32[32,4], index: 1, kind: input, shape index: {}]
  %s2 = inlined_call_operand.vmem [shape: f32[1,4], index: 2, kind: input, shape index: {}]
  %s3 = inlined_call_operand.vmem [shape: f32[8,4], index: 3, kind: output, shape index: {}]
  %s4 = sld [smem:[#allocation0]]
  $region22: #{tpu_custom_call.1} parent=0
    _
  %s6 = ssub.s32 1, %s4
  %s7 = scalar_select 0, %s6, %s4
  // Predicated region
  $region2: #{tpu_custom_call.1} parent=0 // pred_check
    _
  $region3: #{tpu_custom_call.1} parent=0 // pred_check_branch
    %9 = sbr.rel (0) target = $region5
  $region4: #{tpu_custom_call.1} parent=0 // pred_region
    _
  $region5: #{tpu_custom_call.1} parent=0 // pred_fallthru
    _
  // Predicated region
  $region6: #{tpu_custom_call.1} parent=0 // pred_check
    _
  $region7: #{tpu_custom_call.1} parent=0 // pred_check_branch
    %11 = sbr.rel (0) target = $region9
  $region8: #{tpu_custom_call.1} parent=0 // pred_region
    _
  $region9: #{tpu_custom_call.1} parent=0 // pred_fallthru
    _
  // Predicated region
  $region10: #{tpu_custom_call.1} parent=0 // pred_check
    _
  $region11: #{tpu_custom_call.1} parent=0 // pred_check_branch
    %13 = sbr.rel (0) target = $region13
  $region12: #{tpu_custom_call.1} parent=0 // pred_region
    _
  $region13: #{tpu_custom_call.1} parent=0 // pred_fallthru
    _
  %v14 = vld [vmem:[%s0] sm:$0xff]
  %v15 = vld [vmem:[%s1] sm:$0xff]
  %v16 = vld [vmem:[%s1 + $0x8] sm:$0xff]
  %v17 = vld [vmem:[%s1 + $0x10] sm:$0xff]
  %v18 = vld [vmem:[%s1 + $0x18] sm:$0xff]
  %v19 = vld [vmem:[%s2] sm:$0x1]
  %v21 = vlaneseq
  %v22 = vshrl.u32 %v21, 7
  %v23 = vsub.s32 0, %v22
  %v24 = vrot.slane %v19, %v23
  %vm26 = vcmask 261120
  %v28 = vsel %vm26, %v14, 0
  %30 = vmatprep.subr.mxu0 0.0
  %31 = vmatpush1.msra.mxu0 %v15
  %32 = vmatprep.subr.mxu0 0.0
  %33 = vmatpush1.msra.mxu0 %v16
  %34 = vmatprep.subr.mxu0 0.0
  %35 = vmatpush1.msra.mxu0 %v17
  %36 = vmatprep.subr.mxu0 0.0
  %37 = vmatpush1.msra.mxu0 %v18
  %38 = vmatprep.subr.mxu0 0.0
  %39 = vmatpush1.msra.mxu0 0.0
  %40 = vmatprep.subr.mxu0 0.0
  %41 = vmatpush1.msra.mxu0 0.0
  %42 = vmatprep.subr.mxu0 0.0
  %43 = vmatpush1.msra.mxu0 0.0
  %44 = vmatprep.subr.mxu0 0.0
  %45 = vmatpush1.msra.mxu0 0.0
  %46 = vmatprep.subr.mxu0 0.0
  %47 = vmatpush1.msra.mxu0 0.0
  %48 = vmatprep.subr.mxu0 0.0
  %49 = vmatpush1.msra.mxu0 0.0
  %50 = vmatprep.subr.mxu0 0.0
  %51 = vmatpush1.msra.mxu0 0.0
  %52 = vmatprep.subr.mxu0 0.0
  %53 = vmatpush1.msra.mxu0 0.0
  %54 = vmatprep.subr.mxu0 0.0
  %55 = vmatpush1.msra.mxu0 0.0
  %56 = vmatprep.subr.mxu0 0.0
  %57 = vmatpush1.msra.mxu0 0.0
  %58 = vmatprep.subr.mxu0 0.0
  %59 = vmatpush1.msra.mxu0 0.0
  %60 = vmatprep.subr.mxu0 0.0
  %61 = vmatpush1.msra.mxu0 0.0
  %62 = vmatprep.subr.mxu0 0.0
  %63 = vmatpush1.msra.mxu0 0.0
  %64 = vmatprep.subr.mxu0 0.0
  %65 = vmatpush1.msra.mxu0 0.0
  %66 = vmatprep.subr.mxu0 0.0
  %67 = vmatpush1.msra.mxu0 0.0
  %68 = vmatprep.subr.mxu0 0.0
  %69 = vmatpush1.msra.mxu0 0.0
  %70 = vmatprep.subr.mxu0 0.0
  %71 = vmatpush1.msra.mxu0 0.0
  %72 = vmatprep.subr.mxu0 0.0
  %73 = vmatpush1.msra.mxu0 0.0
  %74 = vmatprep.subr.mxu0 0.0
  %75 = vmatpush1.msra.mxu0 0.0
  %76 = vmatprep.subr.mxu0 0.0
  %77 = vmatpush1.msra.mxu0 0.0
  %78 = vmatprep.subr.mxu0 0.0
  %79 = vmatpush1.msra.mxu0 0.0
  %80 = vmatprep.subr.mxu0 0.0
  %81 = vmatpush1.msra.mxu0 0.0
  %82 = vmatprep.subr.mxu0 0.0
  %83 = vmatpush1.msra.mxu0 0.0
  %84 = vmatprep.subr.mxu0 0.0
  %85 = vmatpush1.msra.mxu0 0.0
  %86 = vmatprep.subr.mxu0 0.0
  %87 = vmatpush1.msra.mxu0 0.0
  %88 = vmatprep.subr.mxu0 0.0
  %89 = vmatpush1.msra.mxu0 0.0
  %90 = vmatprep.subr.mxu0 0.0
  %91 = vmatpush1.msra.mxu0 0.0
  %92 = vmatprep.subr.mxu0 0.0
  %93 = vmatpush1.msra.mxu0 0.0
  %94 = vmatprep.mubr.f32.mxu0 0.0
  %95 = vmatmul.mubr.f32.gmra.mrb[0].mxu0 %v28
  %v96 = vpop.f32.mrb[0].mxu0
  %v97 = vadd.f32 %v24, %v96
  %v98 = vpop.f32.mrb[0].mxu0
  %99 = vdwg.mxu0
  %vm100 = vcmask 31744
  %v101 = vsel %vm100, %v97, -inf
  %102 = vmax.xlane.f32.xlu0 %v101
  %v103 = vpop.xlane.xlu0 %102
  %v104 = vsub.f32 %v97, %v103
  %v105 = vmul.f32 %v104, 1.442695
  %v106 = vpow.pop %v105
  %v107 = vsel %vm100, %v106, 0.0
  %108 = vadd.xlane.f32.xlu0 %v107
  %v109 = vpop.xlane.xlu0 %108
  %v110 = vlog2.pop %v109
  %v111 = vmul.f32 %v110, 0.6931472
  %v112 = vadd.f32 %v103, %v111
  %v113 = vsub.f32 %v97, %v112
  %114 = vst.msk [vmem:[%s3] sm:$0xff] %vm100, %v113
  // Predicated region
  $region14: #{tpu_custom_call.1} parent=0 // pred_check
    _
  $region15: #{tpu_custom_call.1} parent=0 // pred_check_branch
    %116 = sbr.rel (0) target = $region17
  $region16: #{tpu_custom_call.1} parent=0 // pred_region
    _
  $region17: #{tpu_custom_call.1} parent=0 // pred_fallthru
    _
  // Predicated region
  $region18: #{tpu_custom_call.1} parent=0 // pred_check
    _
  $region19: #{tpu_custom_call.1} parent=0 // pred_check_branch
    %118 = sbr.rel (0) target = $region21
  $region20: #{tpu_custom_call.1} parent=0 // pred_region
    _
  $region21: #{tpu_custom_call.1} parent=0 // pred_fallthru
    _

</llo_original>
